<compile_context>
chip_gen: v6e
topology: v6e:2x2x1
jax: 0.10.0
libtpu: 0.0.40
codegen_flags: <defaults>
</compile_context>

<pallas_src>
import jax
import jax.numpy as jnp
from jax.experimental import pallas as pl
from jax.experimental.pallas import tpu as pltpu

_MiB = 1024 * 1024
_STD_TM = (1024, 768, 512, 384, 256, 192, 128, 96, 64, 48, 32, 24, 16, 8)


def _round_up(a: int, b: int) -> int:
    return ((a + b - 1) // b) * b


def _vmem_limit_and_budget():
    """Returns (vmem_limit_bytes for Mosaic, byte budget for our tiles)."""
    phys = 64 * _MiB  # conservative default = v7x per-core VMEM
    try:
        phys = int(pltpu.get_tpu_info().vmem_capacity_bytes)
    except Exception:  # best-effort hardware query; keep the safe default
        pass
    limit = min((phys * 7) // 8, 112 * _MiB)   # headroom below physical VMEM
    limit = max(limit, 16 * _MiB)
    budget = max(limit - 8 * _MiB, 8 * _MiB)   # headroom for Mosaic internal scratch
    return limit, budget


def _select_tiles(m, hidden, ffn, x_isize, w_isize, h1_isize, out_isize, budget):
    """VMEM-budget-aware (TM, TF).

    Largest TM first (weight slabs are re-streamed once per M tile, so fewer M tiles
    means less HBM traffic), then the largest TF that still fits the budget.
    """
    # F tile: multiple of 128 that divides ffn, capped at 512; else a single F tile.
    tf_cands = [c for c in (512, 384, 256, 128) if ffn % c == 0]
    if not tf_cands:
        tf_cands = [ffn]

    # M tile: multiple of 8; keep at least two M tiles (both v7x TCs busy) when m > 8.
    m8 = max(_round_up(m, 8), 8)
    if m <= 8:
        tm_cap = m8
    else:
        tm_cap = max(_round_up(-(-m8 // 2), 8), 8)
    tm_cands = [t for t in _STD_TM if t <= tm_cap]
    if tm_cap < _STD_TM[0] and tm_cap not in tm_cands:
        tm_cands = [tm_cap] + tm_cands
    if not tm_cands:
        tm_cands = [m8]

    fallback = (tm_cands[-1], tf_cands[-1])
    for tm in tm_cands:
        for tf in tf_cands:
            need = (2 * hidden * tf * w_isize      # W1 column slab (double-buffered)
                    + 2 * ffn * tf * w_isize       # Wg column slab
                    + 2 * tf * hidden * w_isize    # W2 row slab
                    + 2 * tm * hidden * x_isize    # x row tile
                    + tm * ffn * h1_isize          # h1 VMEM scratch (single copy)
                    + tm * hidden * 4              # f32 accumulator
                    + 2 * tm * hidden * out_isize  # output tile
                    + 4 * (2 * tf + hidden) * 4)   # biases (generous)
            if need <= budget:
                return tm, tf
    return fallback


def _make_swiglu_kernel(tf, grid_f):
    """Fused up-projection + gate + down-projection kernel body."""

    def kernel(x_ref, w1_ref, b1_ref, wg_ref, bg_ref, w2_ref, b2_ref,
               o_ref, h1_scr, acc_ref):
        p = pl.program_id(1)   # phase: 0 = build h1, 1 = gate + down projection
        f = pl.program_id(2)   # F tile

        @pl.when(p == 0)
        def _build_h1():
            h = jnp.dot(x_ref[...], w1_ref[...],
                        preferred_element_type=jnp.float32)
            h = h + b1_ref[...]                              # (TM, TF) + (1, TF)
            if grid_f == 1:
                h1_scr[...] = h.astype(h1_scr.dtype)
            else:
                start = pl.multiple_of(f * tf, 128)          # tf % 128 == 0 here
                h1_scr[:, pl.ds(start, tf)] = h.astype(h1_scr.dtype)

        @pl.when(p == 1)
        def _gate_and_down():
            @pl.when(f == 0)
            def _():
                acc_ref[...] = jnp.zeros_like(acc_ref)

            # v[:, f_tile] = h1 @ Wg[:, f_tile] + bg[f_tile]  (full-F contraction
            # against the VMEM-resident h1 slab; no HBM re-read).
            v = jnp.dot(h1_scr[...], wg_ref[...],
                        preferred_element_type=jnp.float32)
            v = v + bg_ref[...]

            # SiLU gate on the current F tile of h1, in f32 (exp + recip on the EUP).
            if grid_f == 1:
                h_tile = h1_scr[...].astype(jnp.float32)
            else:
                start = pl.multiple_of(f * tf, 128)
                h_tile = h1_scr[:, pl.ds(start, tf)].astype(jnp.float32)
            gate = h_tile * pl.reciprocal(1.0 + jnp.exp(-h_tile), approx=True)

            g = (gate * v).astype(w2_ref.dtype)
            acc_ref[...] += jnp.dot(g, w2_ref[...],
                                    preferred_element_type=jnp.float32)

            @pl.when(f == grid_f - 1)
            def _():
                o_ref[...] = (acc_ref[...] + b2_ref[...]).astype(o_ref.dtype)

    return kernel


@jax.jit
def swiglu_feed_forward(x, w1, b1, wg, bg, w2, b2):
    """x: [..., H]; w1:[H,F]; b1:[F]; wg:[F,F]; bg:[F]; w2:[F,H]; b2:[H]."""
    orig_shape = x.shape
    hidden = x.shape[-1]
    ffn = w1.shape[1]

    x2d = x.reshape(-1, hidden)
    m = x2d.shape[0]

    vmem_limit, vmem_budget = _vmem_limit_and_budget()
    x_isize = jnp.dtype(x.dtype).itemsize
    w_isize = jnp.dtype(w1.dtype).itemsize
    tm, tf = _select_tiles(m, hidden, ffn,
                           x_isize=x_isize, w_isize=w_isize,
                           h1_isize=x_isize, out_isize=x_isize,
                           budget=vmem_budget)

    m_pad = _round_up(m, tm)
    if m_pad != m:
        x2d = jnp.pad(x2d, ((0, m_pad - m), (0, 0)))

    grid_m = m_pad // tm
    grid_f = ffn // tf
    last_f = grid_f - 1

    b1_2d = b1.reshape(1, ffn)
    bg_2d = bg.reshape(1, ffn)
    b2_2d = b2.reshape(1, hidden)

    kernel = _make_swiglu_kernel(tf, grid_f)

    flops = 2 * m_pad * (hidden * ffn + ffn * ffn + ffn * hidden) + 4 * m_pad * ffn
    transcendentals = m_pad * ffn
    bytes_accessed = (m_pad * hidden * 2 * x_isize
                      + grid_m * (hidden * ffn + ffn * ffn + ffn * hidden) * w_isize
                      + (2 * ffn + hidden) * jnp.dtype(b1.dtype).itemsize)

    out2d = pl.pallas_call(
        kernel,
        out_shape=jax.ShapeDtypeStruct((m_pad, hidden), x.dtype),
        grid_spec=pltpu.PrefetchScalarGridSpec(
            num_scalar_prefetch=0,
            grid=(grid_m, 2, grid_f),
            in_specs=[
                # x row tile: resident across the whole (phase, f) sub-grid.
                pl.BlockSpec((tm, hidden), lambda i, p, f: (i, 0)),
                # W1 column slab: streamed in phase 0, pinned (no re-DMA) in phase 1.
                pl.BlockSpec((hidden, tf),
                             lambda i, p, f: (0, f * (1 - p) + last_f * p)),
                pl.BlockSpec((1, tf), lambda i, p, f: (0, f)),            # b1
                # Wg column slab: pinned at block 0 in phase 0, streamed in phase 1.
                pl.BlockSpec((ffn, tf), lambda i, p, f: (0, f * p)),
                pl.BlockSpec((1, tf), lambda i, p, f: (0, f)),            # bg
                # W2 row slab: pinned in phase 0, streamed in phase 1.
                pl.BlockSpec((tf, hidden), lambda i, p, f: (f * p, 0)),
                pl.BlockSpec((1, hidden), lambda i, p, f: (0, 0)),        # b2
            ],
            out_specs=pl.BlockSpec((tm, hidden), lambda i, p, f: (i, 0)),
            scratch_shapes=[
                pltpu.VMEM((tm, ffn), x.dtype),         # h1 row slab (never hits HBM)
                pltpu.VMEM((tm, hidden), jnp.float32),  # down-projection accumulator
            ],
        ),
        compiler_params=pltpu.CompilerParams(
            dimension_semantics=("parallel", "arbitrary", "arbitrary"),
            vmem_limit_bytes=vmem_limit),
        cost_estimate=pl.CostEstimate(flops=flops,
                                      transcendentals=transcendentals,
                                      bytes_accessed=bytes_accessed),
    )(x2d, w1, b1_2d, wg, bg_2d, w2, b2_2d)

    return out2d[:m].reshape(orig_shape)


# ---------------------------------------------------------------------------
# Reference + demo / correctness check
# ---------------------------------------------------------------------------
def _reference(x, w1, b1, wg, bg, w2, b2):
    h1 = x @ w1 + b1
    silu = h1 * (1.0 / (1.0 + jnp.exp(-h1)))
    return (silu * (h1 @ wg + bg)) @ w2 + b2


if __name__ == "__main__":
    batch, seq, hidden, ffn = 2, 8, 32, 64

    key = jax.random.PRNGKey(0)
    kx, kw1, kb1, kwg, kbg, kw2, kb2 = jax.random.split(key, 7)

    x = jax.random.normal(kx, (batch, seq, hidden), dtype=jnp.float32)

    # PyTorch nn.Linear-like uniform init, weights stored as [in, out].
    bound1 = 1.0 / (hidden ** 0.5)   # linear1: in_features = hidden
    boundg = 1.0 / (ffn ** 0.5)      # linear (gate): in_features = ffn
    bound2 = 1.0 / (ffn ** 0.5)      # linear2: in_features = ffn
    w1 = jax.random.uniform(kw1, (hidden, ffn), jnp.float32, -bound1, bound1)
    b1 = jax.random.uniform(kb1, (ffn,), jnp.float32, -bound1, bound1)
    wg = jax.random.uniform(kwg, (ffn, ffn), jnp.float32, -boundg, boundg)
    bg = jax.random.uniform(kbg, (ffn,), jnp.float32, -boundg, boundg)
    w2 = jax.random.uniform(kw2, (ffn, hidden), jnp.float32, -bound2, bound2)
    b2 = jax.random.uniform(kb2, (hidden,), jnp.float32, -bound2, bound2)

    # --- f32 path (matches the PyTorch forward) -----------------------------
    out = jax.block_until_ready(swiglu_feed_forward(x, w1, b1, wg, bg, w2, b2))
    ref = _reference(x, w1, b1, wg, bg, w2, b2)
    assert out.shape == x.shape
    err = float(jnp.max(jnp.abs(out - ref)))
    assert jnp.allclose(out, ref, atol=5e-3, rtol=5e-3), err

    # --- bf16 path (recommended on TPU: halves HBM/VMEM traffic, keeps f32 acc) ----
    args_bf16 = tuple(a.astype(jnp.bfloat16) for a in (x, w1, b1, wg, bg, w2, b2))
    out_bf16 = jax.block_until_ready(swiglu_feed_forward(*args_bf16))
    ref_bf16 = _reference(*(a.astype(jnp.float32) for a in args_bf16))
    assert out_bf16.shape == x.shape
    err_bf16 = float(jnp.max(jnp.abs(out_bf16.astype(jnp.float32) - ref_bf16)))
    assert jnp.allclose(out_bf16.astype(jnp.float32), ref_bf16,
                        atol=7.5e-2, rtol=7.5e-2), err_bf16

    print("KERNEL_OK")
</pallas_src>

<mosaic_0001>
module attributes {stable_mosaic.version = 11 : i64} {
  func.func @kernel(%arg0: i32, %arg1: i32, %arg2: i32, %arg3: memref<8x32xf32, #tpu.memory_space<vmem>>, %arg4: memref<32x64xf32, #tpu.memory_space<vmem>>, %arg5: memref<1x64xf32, #tpu.memory_space<vmem>>, %arg6: memref<64x64xf32, #tpu.memory_space<vmem>>, %arg7: memref<1x64xf32, #tpu.memory_space<vmem>>, %arg8: memref<64x32xf32, #tpu.memory_space<vmem>>, %arg9: memref<1x32xf32, #tpu.memory_space<vmem>>, %arg10: memref<8x32xf32, #tpu.memory_space<vmem>>, %arg11: memref<8x64xf32, #tpu.memory_space<vmem>>, %arg12: memref<8x32xf32, #tpu.memory_space<vmem>>) attributes {dimension_semantics = [#tpu.dimension_semantics<parallel>, #tpu.dimension_semantics<arbitrary>, #tpu.dimension_semantics<arbitrary>], iteration_bounds = array<i64: 2, 2, 1>, scalar_prefetch = 0 : i64, scratch_operands = 2 : i64, tpu.core_type = #tpu.core_type<tc>, window_params = [{transform_indices = @transform_0, window_bounds = array<i64: 8, 32>}, {transform_indices = @transform_1, window_bounds = array<i64: 32, 64>}, {transform_indices = @transform_2, window_bounds = array<i64: 1, 64>}, {transform_indices = @transform_3, window_bounds = array<i64: 64, 64>}, {transform_indices = @transform_4, window_bounds = array<i64: 1, 64>}, {transform_indices = @transform_5, window_bounds = array<i64: 64, 32>}, {pipeline_mode = #tpu.pipeline_mode<synchronous>, transform_indices = @transform_6, window_bounds = array<i64: 1, 32>}, {transform_indices = @transform_7, window_bounds = array<i64: 8, 32>}]} {
    %c0_i32 = arith.constant 0 : i32
    %0 = arith.cmpi eq, %arg1, %c0_i32 : i32
    %1 = arith.extui %0 : i1 to i32
    %c0_i32_0 = arith.constant 0 : i32
    %2 = arith.cmpi ne, %1, %c0_i32_0 : i32
    scf.if %2 {
      %c0 = arith.constant 0 : index
      %c0_2 = arith.constant 0 : index
      %6 = vector.load %arg3[%c0, %c0_2] : memref<8x32xf32, #tpu.memory_space<vmem>>, vector<8x32xf32>
      %c0_3 = arith.constant 0 : index
      %c0_4 = arith.constant 0 : index
      %7 = vector.load %arg4[%c0_3, %c0_4] : memref<32x64xf32, #tpu.memory_space<vmem>>, vector<32x64xf32>
      %cst = arith.constant dense<0.000000e+00> : vector<8x64xf32>
      %8 = tpu.matmul %6, %7, %cst {dimension_numbers = #tpu.dot_dimension_numbers<[1], [0], [0], [1], [0, 0, 1, 1], [], []>} : vector<8x32xf32>, vector<32x64xf32>, vector<8x64xf32> -> vector<8x64xf32>
      %c0_5 = arith.constant 0 : index
      %c0_6 = arith.constant 0 : index
      %9 = vector.load %arg5[%c0_5, %c0_6] : memref<1x64xf32, #tpu.memory_space<vmem>>, vector<1x64xf32>
      %10 = vector.broadcast %9 : vector<1x64xf32> to vector<8x64xf32>
      %11 = arith.addf %8, %10 : vector<8x64xf32>
      %c0_7 = arith.constant 0 : index
      %c0_8 = arith.constant 0 : index
      %12 = vector.load %arg11[%c0_7, %c0_8] : memref<8x64xf32, #tpu.memory_space<vmem>>, vector<8x64xf32>
      tpu.vector_store %arg11[%c0_7, %c0_8], %11 {strides = array<i32>} : memref<8x64xf32, #tpu.memory_space<vmem>>, vector<8x64xf32>,
    } else {
    }
    %c1_i32 = arith.constant 1 : i32
    %3 = arith.cmpi eq, %arg1, %c1_i32 : i32
    %4 = arith.extui %3 : i1 to i32
    %c0_i32_1 = arith.constant 0 : i32
    %5 = arith.cmpi ne, %4, %c0_i32_1 : i32
    scf.if %5 {
      %c0_i32_2 = arith.constant 0 : i32
      %6 = arith.cmpi eq, %arg2, %c0_i32_2 : i32
      %7 = arith.extui %6 : i1 to i32
      %c0_i32_3 = arith.constant 0 : i32
      %8 = arith.cmpi ne, %7, %c0_i32_3 : i32
      scf.if %8 {
        %cst_22 = arith.constant 0.000000e+00 : f32
        %32 = vector.broadcast %cst_22 : f32 to vector<8x32xf32>
        %c0_23 = arith.constant 0 : index
        %c0_24 = arith.constant 0 : index
        %33 = vector.load %arg12[%c0_23, %c0_24] : memref<8x32xf32, #tpu.memory_space<vmem>>, vector<8x32xf32>
        tpu.vector_store %arg12[%c0_23, %c0_24], %32 {strides = array<i32>} : memref<8x32xf32, #tpu.memory_space<vmem>>, vector<8x32xf32>,
      } else {
      }
      %c0 = arith.constant 0 : index
      %c0_4 = arith.constant 0 : index
      %9 = vector.load %arg11[%c0, %c0_4] : memref<8x64xf32, #tpu.memory_space<vmem>>, vector<8x64xf32>
      %c0_5 = arith.constant 0 : index
      %c0_6 = arith.constant 0 : index
      %10 = vector.load %arg6[%c0_5, %c0_6] : memref<64x64xf32, #tpu.memory_space<vmem>>, vector<64x64xf32>
      %cst = arith.constant dense<0.000000e+00> : vector<8x64xf32>
      %11 = tpu.matmul %9, %10, %cst {dimension_numbers = #tpu.dot_dimension_numbers<[1], [0], [0], [1], [0, 0, 1, 1], [], []>} : vector<8x64xf32>, vector<64x64xf32>, vector<8x64xf32> -> vector<8x64xf32>
      %c0_7 = arith.constant 0 : index
      %c0_8 = arith.constant 0 : index
      %12 = vector.load %arg7[%c0_7, %c0_8] : memref<1x64xf32, #tpu.memory_space<vmem>>, vector<1x64xf32>
      %13 = vector.broadcast %12 : vector<1x64xf32> to vector<8x64xf32>
      %14 = arith.addf %11, %13 : vector<8x64xf32>
      %c0_9 = arith.constant 0 : index
      %c0_10 = arith.constant 0 : index
      %15 = vector.load %arg11[%c0_9, %c0_10] : memref<8x64xf32, #tpu.memory_space<vmem>>, vector<8x64xf32>
      %cst_11 = arith.constant 0.000000e+00 : f32
      %16 = vector.broadcast %cst_11 : f32 to vector<8x64xf32>
      %17 = arith.subf %16, %15 : vector<8x64xf32>
      %18 = math.exp %17 : vector<8x64xf32>
      %cst_12 = arith.constant 1.000000e+00 : f32
      %19 = vector.broadcast %cst_12 : f32 to vector<8x64xf32>
      %20 = arith.addf %19, %18 : vector<8x64xf32>
      %21 = tpu.reciprocal %20 {approx = true} : vector<8x64xf32> -> vector<8x64xf32>
      %22 = arith.mulf %15, %21 : vector<8x64xf32>
      %23 = arith.mulf %22, %14 : vector<8x64xf32>
      %c0_13 = arith.constant 0 : index
      %c0_14 = arith.constant 0 : index
      %24 = vector.load %arg12[%c0_13, %c0_14] : memref<8x32xf32, #tpu.memory_space<vmem>>, vector<8x32xf32>
      %c0_15 = arith.constant 0 : index
      %c0_16 = arith.constant 0 : index
      %25 = vector.load %arg8[%c0_15, %c0_16] : memref<64x32xf32, #tpu.memory_space<vmem>>, vector<64x32xf32>
      %cst_17 = arith.constant dense<0.000000e+00> : vector<8x32xf32>
      %26 = tpu.matmul %23, %25, %cst_17 {dimension_numbers = #tpu.dot_dimension_numbers<[1], [0], [0], [1], [0, 0, 1, 1], [], []>} : vector<8x64xf32>, vector<64x32xf32>, vector<8x32xf32> -> vector<8x32xf32>
      %27 = arith.addf %24, %26 : vector<8x32xf32>
      %c0_18 = arith.constant 0 : index
      %c0_19 = arith.constant 0 : index
      %28 = vector.load %arg12[%c0_18, %c0_19] : memref<8x32xf32, #tpu.memory_space<vmem>>, vector<8x32xf32>
      tpu.vector_store %arg12[%c0_18, %c0_19], %27 {strides = array<i32>} : memref<8x32xf32, #tpu.memory_space<vmem>>, vector<8x32xf32>,
      %c0_i32_20 = arith.constant 0 : i32
      %29 = arith.cmpi eq, %arg2, %c0_i32_20 : i32
      %30 = arith.extui %29 : i1 to i32
      %c0_i32_21 = arith.constant 0 : i32
      %31 = arith.cmpi ne, %30, %c0_i32_21 : i32
      scf.if %31 {
        %c0_22 = arith.constant 0 : index
        %c0_23 = arith.constant 0 : index
        %32 = vector.load %arg12[%c0_22, %c0_23] : memref<8x32xf32, #tpu.memory_space<vmem>>, vector<8x32xf32>
        %c0_24 = arith.constant 0 : index
        %c0_25 = arith.constant 0 : index
        %33 = vector.load %arg9[%c0_24, %c0_25] : memref<1x32xf32, #tpu.memory_space<vmem>>, vector<1x32xf32>
        %34 = vector.broadcast %33 : vector<1x32xf32> to vector<8x32xf32>
        %35 = arith.addf %32, %34 : vector<8x32xf32>
        %c0_26 = arith.constant 0 : index
        %c0_27 = arith.constant 0 : index
        %36 = vector.load %arg10[%c0_26, %c0_27] : memref<8x32xf32, #tpu.memory_space<vmem>>, vector<8x32xf32>
        tpu.vector_store %arg10[%c0_26, %c0_27], %35 {strides = array<i32>} : memref<8x32xf32, #tpu.memory_space<vmem>>, vector<8x32xf32>,
      } else {
      }
    } else {
    }
    return
  }
  func.func @transform_0(%arg0: i32, %arg1: i32, %arg2: i32) -> (i32, i32) {
    %c0_i32 = arith.constant 0 : i32
    %c0_i32_0 = arith.constant 0 : i32
    return %arg0, %c0_i32 : i32, i32
  }
  func.func @transform_1(%arg0: i32, %arg1: i32, %arg2: i32) -> (i32, i32) {
    %c1_i32 = arith.constant 1 : i32
    %0 = arith.subi %c1_i32, %arg1 : i32
    %1 = arith.muli %arg2, %0 : i32
    %c0_i32 = arith.constant 0 : i32
    %2 = arith.muli %c0_i32, %arg1 : i32
    %3 = arith.addi %1, %2 : i32
    %c0_i32_0 = arith.constant 0 : i32
    %c0_i32_1 = arith.constant 0 : i32
    return %c0_i32_0, %3 : i32, i32
  }
  func.func @transform_2(%arg0: i32, %arg1: i32, %arg2: i32) -> (i32, i32) {
    %c0_i32 = arith.constant 0 : i32
    %c0_i32_0 = arith.constant 0 : i32
    return %c0_i32, %arg2 : i32, i32
  }
  func.func @transform_3(%arg0: i32, %arg1: i32, %arg2: i32) -> (i32, i32) {
    %0 = arith.muli %arg2, %arg1 : i32
    %c0_i32 = arith.constant 0 : i32
    %c0_i32_0 = arith.constant 0 : i32
    return %c0_i32, %0 : i32, i32
  }
  func.func @transform_4(%arg0: i32, %arg1: i32, %arg2: i32) -> (i32, i32) {
    %c0_i32 = arith.constant 0 : i32
    %c0_i32_0 = arith.constant 0 : i32
    return %c0_i32, %arg2 : i32, i32
  }
  func.func @transform_5(%arg0: i32, %arg1: i32, %arg2: i32) -> (i32, i32) {
    %0 = arith.muli %arg2, %arg1 : i32
    %c0_i32 = arith.constant 0 : i32
    %c0_i32_0 = arith.constant 0 : i32
    return %0, %c0_i32 : i32, i32
  }
  func.func @transform_6(%arg0: i32, %arg1: i32, %arg2: i32) -> (i32, i32) {
    %c0_i32 = arith.constant 0 : i32
    %c0_i32_0 = arith.constant 0 : i32
    %c0_i32_1 = arith.constant 0 : i32
    return %c0_i32, %c0_i32_0 : i32, i32
  }
  func.func @transform_7(%arg0: i32, %arg1: i32, %arg2: i32) -> (i32, i32) {
    %c0_i32 = arith.constant 0 : i32
    %c0_i32_0 = arith.constant 0 : i32
    return %arg0, %c0_i32 : i32, i32
  }
}

</mosaic_0001>

<llo_original>
// kernel: swiglu_feed_forward.1
$region0: #{swiglu_feed_forward.1}
  #allocation0 [shape = 'u32[]', space=smem, size = 0x4, offset = 0x4, fixed_abs, tag = 'smem constant byte address 0x4 - core index']
  #allocation1 [shape = 'u32[144,128]{1,0:T(1,128)}', space=vmem, size = 0x12000, scoped, tag = 'internal scratch']
  #allocation2 [shape = 'f32[8,64]{1,0:T(8,128)}', space=vmem, size = 0x1000, scoped, tag = 'scratch operand']
  #allocation3 [shape = 'f32[8,32]{1,0:T(8,128)}', space=vmem, size = 0x1000, scoped, tag = 'scratch operand']
  %s0 = inlined_call_operand.hbm [shape: f32[16,32], index: 0, kind: input, shape index: {}]
  %s1 = inlined_call_operand.vmem [shape: f32[32,64], index: 1, kind: input, shape index: {}]
  %s2 = inlined_call_operand.vmem [shape: f32[1,64], index: 2, kind: input, shape index: {}]
  %s3 = inlined_call_operand.vmem [shape: f32[64,64], index: 3, kind: input, shape index: {}]
  %s4 = inlined_call_operand.vmem [shape: f32[1,64], index: 4, kind: input, shape index: {}]
  %s5 = inlined_call_operand.vmem [shape: f32[64,32], index: 5, kind: input, shape index: {}]
  %s6 = inlined_call_operand.vmem [shape: f32[1,32], index: 6, kind: input, shape index: {}]
  %s7 = inlined_call_operand.hbm [shape: f32[16,32], index: 7, kind: output, shape index: {}]
  %s8 = sld [smem:[#allocation0]]
  $region81: #{swiglu_feed_forward.1} parent=0
    _
  %s10 = ssub.s32 1, %s8
  %s11 = scalar_select 0, %s10, %s8
  $region1: #{swiglu_feed_forward.1} parent=0
    #allocation4 [shape = 'u8[8192]{0}', space=vmem, size = 0x2000, scoped, tag = 'input window, operand 0']
    #allocation5 [shape = 's32[2]{0}', space=sflag, size = 0x8, scoped, tag = 'scoped memory for swiglu_feed_forward.1']
    #allocation6 [shape = 's32[2]{0}', space=sflag, size = 0x8, scoped, tag = 'scoped memory for swiglu_feed_forward.1']
    #allocation7 [shape = 'u8[8192]{0}', space=vmem, size = 0x2000, scoped, tag = 'output window, operand 0']
    %12 = vsyncpa [#allocation5], 0
    %s13 = scalar_lea.sflag [#allocation5], 1
    %14 = vsyncpa %s13, 0
    %15 = vsyncpa [#allocation6], 0
    %s16 = scalar_lea.sflag [#allocation6], 1
    %17 = vsyncpa %s16, 0
    loop: start=0, step=1, limit=6
    $region2: #{swiglu_feed_forward.1} parent=1 // loop_pre_header
      _
    $region3: #{swiglu_feed_forward.1} parent=1 // loop_header
      %s19 = sphi 0, %s23
      %p20 = scmp.ge.s32.totalorder %s19, 6
      %s26 = sphi 0, %s45
      %s27 = sphi 0, %s41
      %s28 = sphi 0, %s37
      %s29 = sphi 0, %s26
      %s30 = sphi 0, %s27
      %s31 = sphi 0, %s28
      %s32 = sphi 0, %s29
      %s33 = sphi 0, %s30
      %s34 = sphi 0, %s31
      %s48 = sphi 0, %s50
      %s51 = sphi 0, %s48
      %s52 = sphi 0, %s51
      %s68 = sphi 0, %s52
      %s78 = sphi 0, %s80
      %s81 = sphi 0, %s78
      %s82 = sphi 0, %s81
      %s98 = sphi 0, %s82
      %s104 = sphi 0, %s106
      %s107 = sphi 0, %s104
      %s108 = sphi 0, %s107
      %s124 = sphi 0, %s108
      %s132 = sphi 0, %s134
      %s135 = sphi 0, %s132
      %s136 = sphi 0, %s135
      %s152 = sphi 0, %s136
      %s158 = sphi 0, %s160
      %s161 = sphi 0, %s158
      %s162 = sphi 0, %s161
      %s178 = sphi 0, %s162
      %s186 = sphi 0, %s188
      %s189 = sphi 0, %s186
      %s190 = sphi 0, %s189
      %s206 = sphi 0, %s190
      %s210 = sphi 0, %s210
      %s212 = sphi 0, %s210
      %s213 = sphi 0, %s212
      %s227 = sphi 0, %s213
      %s233 = sphi 0, %s235
      %s236 = sphi 0, %s233
      %s237 = sphi 0, %s236
      %s253 = sphi 0, %s237
    $region4: #{swiglu_feed_forward.1} parent=1 // loop_header_branch
      %22 = sbr.rel (%p20) target = $region8
    $region5: #{swiglu_feed_forward.1} parent=1 // loop_body
      %s24 = ssub.s32 %s19, 1
      %s25 = ssub.s32 %s19, 2
      %s35 = sadd.s32 1, %s28
      %p36 = scmp.ge.s32.totalorder %s35, 1
      %s37 = scalar_select %p36, 0, %s35
      %s38 = sadd.s32 1, %s27
      %s39 = scalar_select %p36, %s38, %s27
      %p40 = scmp.ge.s32.totalorder %s39, 2
      %s41 = scalar_select %p40, 0, %s39
      %s42 = sadd.s32 1, %s26
      %s43 = scalar_select %p40, %s42, %s26
      %p44 = scmp.ge.s32.totalorder %s43, 2
      %s45 = scalar_select %p44, 0, %s43
      %s46 = ssub.s32 %s26, %s45
      %p47 = scmp.eq.s32.totalorder %s46, 0
      %s49 = sadd.s32 %s48, 1
      %s50 = scalar_select %p47, %s48, %s49
      %p53 = pneg %p47
      %p54 = scmp.eq.s32.totalorder %s19, 3
      %p55 = por %p53, %p54
      %p56 = scmp.ne.s32.totalorder %s48, %s51
      %p57 = scmp.eq.s32.totalorder %s19, 0
      %p58 = por %p56, %p57
      %p59 = scmp.ne.s32.totalorder %s48, %s51
      %p60 = scmp.eq.s32.totalorder %s24, 3
      %p61 = por %p59, %p60
      %p62 = scmp.ne.s32.totalorder %s51, %s52
      %p63 = scmp.eq.s32.totalorder %s24, 0
      %p64 = por %p62, %p63
      %p65 = scmp.ne.s32.totalorder %s51, %s52
      %p66 = scmp.eq.s32.totalorder %s25, 3
      %p67 = por %p65, %p66
      %p69 = scmp.ne.s32.totalorder %s52, %s68
      %p70 = scmp.eq.s32.totalorder %s25, 0
      %p71 = por %p69, %p70
      %s72 = ssub.s32 1, %s27
      %s73 = smul.u32 %s28, %s72
      %s74 = ssub.s32 1, %s41
      %s75 = smul.u32 %s37, %s74
      %s76 = ssub.s32 %s73, %s75
      %p77 = scmp.eq.s32.totalorder %s76, 0
      %s79 = sadd.s32 %s78, 1
      %s80 = scalar_select %p77, %s78, %s79
      %p83 = pneg %p77
      %p84 = scmp.eq.s32.totalorder %s19, 3
      %p85 = por %p83, %p84
      %p86 = scmp.ne.s32.totalorder %s78, %s81
      %p87 = scmp.eq.s32.totalorder %s19, 0
      %p88 = por %p86, %p87
      %p89 = scmp.ne.s32.totalorder %s78, %s81
      %p90 = scmp.eq.s32.totalorder %s24, 3
      %p91 = por %p89, %p90
      %p92 = scmp.ne.s32.totalorder %s81, %s82
      %p93 = scmp.eq.s32.totalorder %s24, 0
      %p94 = por %p92, %p93
      %p95 = scmp.ne.s32.totalorder %s81, %s82
      %p96 = scmp.eq.s32.totalorder %s25, 3
      %p97 = por %p95, %p96
      %p99 = scmp.ne.s32.totalorder %s82, %s98
      %p100 = scmp.eq.s32.totalorder %s25, 0
      %p101 = por %p99, %p100
      %s102 = ssub.s32 %s28, %s37
      %p103 = scmp.eq.s32.totalorder %s102, 0
      %s105 = sadd.s32 %s104, 1
      %s106 = scalar_select %p103, %s104, %s105
      %p109 = pneg %p103
      %p110 = scmp.eq.s32.totalorder %s19, 3
      %p111 = por %p109, %p110
      %p112 = scmp.ne.s32.totalorder %s104, %s107
      %p113 = scmp.eq.s32.totalorder %s19, 0
      %p114 = por %p112, %p113
      %p115 = scmp.ne.s32.totalorder %s104, %s107
      %p116 = scmp.eq.s32.totalorder %s24, 3
      %p117 = por %p115, %p116
      %p118 = scmp.ne.s32.totalorder %s107, %s108
      %p119 = scmp.eq.s32.totalorder %s24, 0
      %p120 = por %p118, %p119
      %p121 = scmp.ne.s32.totalorder %s107, %s108
      %p122 = scmp.eq.s32.totalorder %s25, 3
      %p123 = por %p121, %p122
      %p125 = scmp.ne.s32.totalorder %s108, %s124
      %p126 = scmp.eq.s32.totalorder %s25, 0
      %p127 = por %p125, %p126
      %s128 = smul.u32 %s28, %s27
      %s129 = smul.u32 %s37, %s41
      %s130 = ssub.s32 %s128, %s129
      %p131 = scmp.eq.s32.totalorder %s130, 0
      %s133 = sadd.s32 %s132, 1
      %s134 = scalar_select %p131, %s132, %s133
      %p137 = pneg %p131
      %p138 = scmp.eq.s32.totalorder %s19, 3
      %p139 = por %p137, %p138
      %p140 = scmp.ne.s32.totalorder %s132, %s135
      %p141 = scmp.eq.s32.totalorder %s19, 0
      %p142 = por %p140, %p141
      %p143 = scmp.ne.s32.totalorder %s132, %s135
      %p144 = scmp.eq.s32.totalorder %s24, 3
      %p145 = por %p143, %p144
      %p146 = scmp.ne.s32.totalorder %s135, %s136
      %p147 = scmp.eq.s32.totalorder %s24, 0
      %p148 = por %p146, %p147
      %p149 = scmp.ne.s32.totalorder %s135, %s136
      %p150 = scmp.eq.s32.totalorder %s25, 3
      %p151 = por %p149, %p150
      %p153 = scmp.ne.s32.totalorder %s136, %s152
      %p154 = scmp.eq.s32.totalorder %s25, 0
      %p155 = por %p153, %p154
      %s156 = ssub.s32 %s28, %s37
      %p157 = scmp.eq.s32.totalorder %s156, 0
      %s159 = sadd.s32 %s158, 1
      %s160 = scalar_select %p157, %s158, %s159
      %p163 = pneg %p157
      %p164 = scmp.eq.s32.totalorder %s19, 3
      %p165 = por %p163, %p164
      %p166 = scmp.ne.s32.totalorder %s158, %s161
      %p167 = scmp.eq.s32.totalorder %s19, 0
      %p168 = por %p166, %p167
      %p169 = scmp.ne.s32.totalorder %s158, %s161
      %p170 = scmp.eq.s32.totalorder %s24, 3
      %p171 = por %p169, %p170
      %p172 = scmp.ne.s32.totalorder %s161, %s162
      %p173 = scmp.eq.s32.totalorder %s24, 0
      %p174 = por %p172, %p173
      %p175 = scmp.ne.s32.totalorder %s161, %s162
      %p176 = scmp.eq.s32.totalorder %s25, 3
      %p177 = por %p175, %p176
      %p179 = scmp.ne.s32.totalorder %s162, %s178
      %p180 = scmp.eq.s32.totalorder %s25, 0
      %p181 = por %p179, %p180
      %s182 = smul.u32 %s28, %s27
      %s183 = smul.u32 %s37, %s41
      %s184 = ssub.s32 %s182, %s183
      %p185 = scmp.eq.s32.totalorder %s184, 0
      %s187 = sadd.s32 %s186, 1
      %s188 = scalar_select %p185, %s186, %s187
      %p191 = pneg %p185
      %p192 = scmp.eq.s32.totalorder %s19, 3
      %p193 = por %p191, %p192
      %p194 = scmp.ne.s32.totalorder %s186, %s189
      %p195 = scmp.eq.s32.totalorder %s19, 0
      %p196 = por %p194, %p195
      %p197 = scmp.ne.s32.totalorder %s186, %s189
      %p198 = scmp.eq.s32.totalorder %s24, 3
      %p199 = por %p197, %p198
      %p200 = scmp.ne.s32.totalorder %s189, %s190
      %p201 = scmp.eq.s32.totalorder %s24, 0
      %p202 = por %p200, %p201
      %p203 = scmp.ne.s32.totalorder %s189, %s190
      %p204 = scmp.eq.s32.totalorder %s25, 3
      %p205 = por %p203, %p204
      %p207 = scmp.ne.s32.totalorder %s190, %s206
      %p208 = scmp.eq.s32.totalorder %s25, 0
      %p209 = por %p207, %p208
      %s211 = sadd.s32 %s210, 1
      %p214 = scmp.eq.s32.totalorder %s19, 3
      %p215 = scmp.ne.s32.totalorder %s210, %s212
      %p216 = scmp.eq.s32.totalorder %s19, 0
      %p217 = por %p215, %p216
      %p218 = scmp.ne.s32.totalorder %s210, %s212
      %p219 = scmp.eq.s32.totalorder %s24, 3
      %p220 = por %p218, %p219
      %p221 = scmp.ne.s32.totalorder %s212, %s213
      %p222 = scmp.eq.s32.totalorder %s24, 0
      %p223 = por %p221, %p222
      %p224 = scmp.ne.s32.totalorder %s212, %s213
      %p225 = scmp.eq.s32.totalorder %s25, 3
      %p226 = por %p224, %p225
      %p228 = scmp.ne.s32.totalorder %s213, %s227
      %p229 = scmp.eq.s32.totalorder %s25, 0
      %p230 = por %p228, %p229
      %s231 = ssub.s32 %s26, %s45
      %p232 = scmp.eq.s32.totalorder %s231, 0
      %s234 = sadd.s32 %s233, 1
      %s235 = scalar_select %p232, %s233, %s234
      %p238 = pneg %p232
      %p239 = scmp.eq.s32.totalorder %s19, 3
      %p240 = por %p238, %p239
      %p241 = scmp.ne.s32.totalorder %s233, %s236
      %p242 = scmp.eq.s32.totalorder %s19, 0
      %p243 = por %p241, %p242
      %p244 = scmp.ne.s32.totalorder %s233, %s236
      %p245 = scmp.eq.s32.totalorder %s24, 3
      %p246 = por %p244, %p245
      %p247 = scmp.ne.s32.totalorder %s236, %s237
      %p248 = scmp.eq.s32.totalorder %s24, 0
      %p249 = por %p247, %p248
      %p250 = scmp.ne.s32.totalorder %s236, %s237
      %p251 = scmp.eq.s32.totalorder %s25, 3
      %p252 = por %p250, %p251
      %p254 = scmp.ne.s32.totalorder %s237, %s253
      %p255 = scmp.eq.s32.totalorder %s25, 0
      %p256 = por %p254, %p255
      %p257 = scmp.le.s32.totalorder 1, %s19
      %p258 = scmp.lt.s32.totalorder %s19, 5
      %p259 = pnand %p257, %p258
      %p260 = pneg %p259
      // Predicated region
      $region9: #{swiglu_feed_forward.1} parent=5 // pred_check
        _
      $region10: #{swiglu_feed_forward.1} parent=5 // pred_check_branch
        %262 = sbr.rel (%p259) target = $region12
      $region11: #{swiglu_feed_forward.1} parent=5 // pred_region
        %s263 = ssub.s32 %s19, 1
        // Predicated region
        $region13: #{swiglu_feed_forward.1} parent=11 // pred_check
          %p264 = pneg %p120
        $region14: #{swiglu_feed_forward.1} parent=11 // pred_check_branch
          %266 = sbr.rel (%p264) target = $region16
        $region15: #{swiglu_feed_forward.1} parent=11 // pred_region
          %p267 = scmp.lt.s32.totalorder %s31, 0
          %s268 = scalar_select %p267, %s31, 0
          %s269 = scalar_lea.vmem %s2, %s268
        $region16: #{swiglu_feed_forward.1} parent=11 // pred_fallthru
          _
        // Predicated region
        $region17: #{swiglu_feed_forward.1} parent=11 // pred_check
          %p270 = pneg %p174
        $region18: #{swiglu_feed_forward.1} parent=11 // pred_check_branch
          %272 = sbr.rel (%p270) target = $region20
        $region19: #{swiglu_feed_forward.1} parent=11 // pred_region
          %p273 = scmp.lt.s32.totalorder %s31, 0
          %s274 = scalar_select %p273, %s31, 0
          %s275 = scalar_lea.vmem %s4, %s274
        $region20: #{swiglu_feed_forward.1} parent=11 // pred_fallthru
          _
        // Predicated region
        $region21: #{swiglu_feed_forward.1} parent=11 // pred_check
          %p276 = pneg %p223
        $region22: #{swiglu_feed_forward.1} parent=11 // pred_check_branch
          %278 = sbr.rel (%p276) target = $region24
        $region23: #{swiglu_feed_forward.1} parent=11 // pred_region
          _
        $region24: #{swiglu_feed_forward.1} parent=11 // pred_fallthru
          _
      $region12: #{swiglu_feed_forward.1} parent=5 // pred_fallthru
        _
      %p279 = scmp.lt.s32.totalorder %s19, 4
      // Predicated region
      $region25: #{swiglu_feed_forward.1} parent=5 // pred_check
        %p280 = pneg %p279
      $region26: #{swiglu_feed_forward.1} parent=5 // pred_check_branch
        %282 = sbr.rel (%p280) target = $region28
      $region27: #{swiglu_feed_forward.1} parent=5 // pred_region
        // Predicated region
        $region29: #{swiglu_feed_forward.1} parent=27 // pred_check
          %p283 = pneg %p58
        $region30: #{swiglu_feed_forward.1} parent=27 // pred_check_branch
          %285 = sbr.rel (%p283) target = $region32
        $region31: #{swiglu_feed_forward.1} parent=27 // pred_region
          %s286 = sand.u32 %s48, 1
          %s287 = scalar_lea.sflag [#allocation5], %s286
          %s288 = sand.u32 %s48, 1
          %s289 = smul.addr %s288, 8
          %s290 = scalar_lea.vmem [#allocation4], %s289
          %s292 = ssub.s32 128, 128
          %293 = vsyncadd %s287, %s292
          %s294 = smul.addr %s26, 128
          %s295 = scalar_lea.hbm %s0, %s294
          %s297 = sshll.u32 %s290, 4
          %s298 = int_to_ptr.vmem [resolvable:$true] %s297
          %300 = dma.hbm_to_vmem [thread:$0]  %s295, 128, %s298, %s287
        $region32: #{swiglu_feed_forward.1} parent=27 // pred_fallthru
          _
        // Predicated region
        $region33: #{swiglu_feed_forward.1} parent=27 // pred_check
          %p301 = pneg %p88
        $region34: #{swiglu_feed_forward.1} parent=27 // pred_check_branch
          %303 = sbr.rel (%p301) target = $region36
        $region35: #{swiglu_feed_forward.1} parent=27 // pred_region
          %s304 = ssub.s32 1, %s27
          %s305 = smul.u32 %s28, %s304
          %p306 = scmp.lt.s32.totalorder %s305, 0
          %s307 = scalar_select %p306, %s305, 0
          %s308 = smul.addr %s307, 8
          %s309 = scalar_lea.vmem %s1, %s308
          %s310 = ssub.s32 1, %s27
          %s311 = smul.u32 %s28, %s310
        $region36: #{swiglu_feed_forward.1} parent=27 // pred_fallthru
          _
        // Predicated region
        $region37: #{swiglu_feed_forward.1} parent=27 // pred_check
          %p312 = pneg %p142
        $region38: #{swiglu_feed_forward.1} parent=27 // pred_check_branch
          %314 = sbr.rel (%p312) target = $region40
        $region39: #{swiglu_feed_forward.1} parent=27 // pred_region
          %s315 = smul.u32 %s28, %s27
          %p316 = scmp.lt.s32.totalorder %s315, 0
          %s317 = scalar_select %p316, %s315, 0
          %s318 = smul.addr %s317, 8
          %s319 = scalar_lea.vmem %s3, %s318
          %s320 = smul.u32 %s28, %s27
        $region40: #{swiglu_feed_forward.1} parent=27 // pred_fallthru
          _
        // Predicated region
        $region41: #{swiglu_feed_forward.1} parent=27 // pred_check
          %p321 = pneg %p196
        $region42: #{swiglu_feed_forward.1} parent=27 // pred_check_branch
          %323 = sbr.rel (%p321) target = $region44
        $region43: #{swiglu_feed_forward.1} parent=27 // pred_region
          %s324 = smul.u32 %s28, %s27
          %s325 = smul.u32 8, %s324
          %p326 = scmp.lt.s32.totalorder %s325, 7
          %s327 = scalar_select %p326, %s325, 7
          %s328 = smul.addr %s327, 8
          %s329 = scalar_lea.vmem %s5, %s328
          %s330 = smul.u32 %s28, %s27
          %s331 = smul.u32 8, %s330
        $region44: #{swiglu_feed_forward.1} parent=27 // pred_fallthru
          _
      $region28: #{swiglu_feed_forward.1} parent=5 // pred_fallthru
        _
      %p332 = scmp.le.s32.totalorder 1, %s19
      %p333 = scmp.lt.s32.totalorder %s19, 5
      %p334 = pnand %p332, %p333
      %p335 = pneg %p334
      // Predicated region
      $region45: #{swiglu_feed_forward.1} parent=5 // pred_check
        _
      $region46: #{swiglu_feed_forward.1} parent=5 // pred_check_branch
        %337 = sbr.rel (%p334) target = $region48
      $region47: #{swiglu_feed_forward.1} parent=5 // pred_region
        %s338 = ssub.s32 %s19, 1
        %s339 = sand.u32 %s51, 1
        %s340 = scalar_lea.sflag [#allocation5], %s339
        %s341 = sand.u32 %s51, 1
        %s342 = smul.addr %s341, 8
        %s343 = scalar_lea.vmem [#allocation4], %s342
        // Predicated region
        $region49: #{swiglu_feed_forward.1} parent=47 // pred_check
          %p344 = pneg %p64
        $region50: #{swiglu_feed_forward.1} parent=47 // pred_check_branch
          %346 = sbr.rel (%p344) target = $region52
        $region51: #{swiglu_feed_forward.1} parent=47 // pred_region
          %347 = dma.done %s340, 128
        $region52: #{swiglu_feed_forward.1} parent=47 // pred_fallthru
          _
        %s348 = sand.u32 %s51, 1
        %s349 = scalar_lea.sflag [#allocation5], %s348
        %s350 = sand.u32 %s51, 1
        %s351 = smul.addr %s350, 8
        %s352 = scalar_lea.vmem [#allocation4], %s351
        %p353 = pneg %p64
        %p354 = pneg %p61
        %s355 = ssub.s32 1, %s30
        %s356 = smul.u32 %s31, %s355
        %p357 = scmp.lt.s32.totalorder %s356, 0
        %s358 = scalar_select %p357, %s356, 0
        %s359 = smul.addr %s358, 8
        %s360 = scalar_lea.vmem %s1, %s359
        %p361 = pneg %p94
        %p362 = pneg %p91
        %p363 = scmp.lt.s32.totalorder %s31, 0
        %s364 = scalar_select %p363, %s31, 0
        %s365 = scalar_lea.vmem %s2, %s364
        %p366 = pneg %p120
        %p367 = pneg %p117
        %s368 = smul.u32 %s31, %s30
        %p369 = scmp.lt.s32.totalorder %s368, 0
        %s370 = scalar_select %p369, %s368, 0
        %s371 = smul.addr %s370, 8
        %s372 = scalar_lea.vmem %s3, %s371
        %p373 = pneg %p148
        %p374 = pneg %p145
        %p375 = scmp.lt.s32.totalorder %s31, 0
        %s376 = scalar_select %p375, %s31, 0
        %s377 = scalar_lea.vmem %s4, %s376
        %p378 = pneg %p174
        %p379 = pneg %p171
        %s380 = smul.u32 %s31, %s30
        %s381 = smul.u32 8, %s380
        %p382 = scmp.lt.s32.totalorder %s381, 7
        %s383 = scalar_select %p382, %s381, 7
        %s384 = smul.addr %s383, 8
        %s385 = scalar_lea.vmem %s5, %s384
        %p386 = pneg %p202
        %p387 = pneg %p199
        %p388 = pneg %p223
        %p389 = pneg %p220
        %p390 = pneg %p249
        %p391 = pneg %p246
        %s392 = sand.u32 %s236, 1
        %s393 = scalar_lea.sflag [#allocation6], %s392
        %s394 = sand.u32 %s236, 1
        %s395 = smul.addr %s394, 8
        %s396 = scalar_lea.vmem [#allocation7], %s395
        %s397 = ssub.s32 1, %s30
        %s398 = smul.u32 %s31, %s397
        %p399 = scmp.lt.s32.totalorder %s398, 0
        %s400 = scalar_select %p399, %s398, 0
        %s401 = smul.addr %s400, 8
        %s402 = scalar_lea.vmem %s1, %s401
        %s403 = ssub.s32 1, %s30
        %s404 = smul.u32 %s31, %s403
        %p405 = scmp.lt.s32.totalorder %s31, 0
        %s406 = scalar_select %p405, %s31, 0
        %s407 = scalar_lea.vmem %s2, %s406
        %s408 = smul.u32 %s31, %s30
        %p409 = scmp.lt.s32.totalorder %s408, 0
        %s410 = scalar_select %p409, %s408, 0
        %s411 = smul.addr %s410, 8
        %s412 = scalar_lea.vmem %s3, %s411
        %s413 = smul.u32 %s31, %s30
        %p414 = scmp.lt.s32.totalorder %s31, 0
        %s415 = scalar_select %p414, %s31, 0
        %s416 = scalar_lea.vmem %s4, %s415
        %s417 = smul.u32 %s31, %s30
        %s418 = smul.u32 8, %s417
        %p419 = scmp.lt.s32.totalorder %s418, 7
        %s420 = scalar_select %p419, %s418, 7
        %s421 = smul.addr %s420, 8
        %s422 = scalar_lea.vmem %s5, %s421
        %s423 = smul.u32 %s31, %s30
        %s424 = smul.u32 8, %s423
        %p425 = scmp.eq.s32.totalorder %s30, 0
        // Predicated region
        $region53: #{swiglu_feed_forward.1} parent=47 // pred_check
          %p426 = pneg %p425
        $region54: #{swiglu_feed_forward.1} parent=47 // pred_check_branch
          %428 = sbr.rel (%p426) target = $region56
        $region55: #{swiglu_feed_forward.1} parent=47 // pred_region
          %v429 = vld [vmem:[%s343] sm:$0xff]
          %v430 = vld [vmem:[%s402] sm:$0xff]
          %v431 = vld [vmem:[%s402 + $0x8] sm:$0xff]
          %v432 = vld [vmem:[%s402 + $0x10] sm:$0xff]
          %v433 = vld [vmem:[%s402 + $0x18] sm:$0xff]
          %v434 = vld [vmem:[%s407] sm:$0x1]
          %v436 = vlaneseq
          %v437 = vshrl.u32 %v436, 7
          %v438 = vsub.s32 0, %v437
          %v439 = vrot.slane %v434, %v438
          %vm441 = vcmask 261120
          %v443 = vsel %vm441, %v429, 0
          %445 = vmatprep.subr.mxu0 0.0
          %446 = vmatpush1.msra.mxu0 0.0
          %447 = vmatprep.subr.mxu0 0.0
          %448 = vmatpush1.msra.mxu0 0.0
          %449 = vmatprep.subr.mxu0 0.0
          %450 = vmatpush1.msra.mxu0 0.0
          %451 = vmatprep.subr.mxu0 0.0
          %452 = vmatpush1.msra.mxu0 0.0
          %453 = vmatprep.subr.mxu0 0.0
          %454 = vmatpush1.msra.mxu0 0.0
          %455 = vmatprep.subr.mxu0 0.0
          %456 = vmatpush1.msra.mxu0 0.0
          %457 = vmatprep.subr.mxu0 0.0
          %458 = vmatpush1.msra.mxu0 0.0
          %459 = vmatprep.subr.mxu0 0.0
          %460 = vmatpush1.msra.mxu0 0.0
          %461 = vmatprep.subr.mxu0 0.0
          %462 = vmatpush1.msra.mxu0 0.0
          %463 = vmatprep.subr.mxu0 0.0
          %464 = vmatpush1.msra.mxu0 0.0
          %465 = vmatprep.subr.mxu0 0.0
          %466 = vmatpush1.msra.mxu0 0.0
          %467 = vmatprep.subr.mxu0 0.0
          %468 = vmatpush1.msra.mxu0 0.0
          %469 = vmatprep.subr.mxu0 0.0
          %470 = vmatpush1.msra.mxu0 %v433
          %471 = vmatprep.subr.mxu0 0.0
          %472 = vmatpush1.msra.mxu0 %v432
          %473 = vmatprep.subr.mxu0 0.0
          %474 = vmatpush1.msra.mxu0 %v431
          %475 = vmatprep.subr.mxu0 0.0
          %476 = vmatpush1.msra.mxu0 %v430
          %477 = vmatprep.subr.mxu0 0.0
          %478 = vmatpush2.msra.mxu0 0.0
          %479 = vmatprep.subr.mxu0 0.0
          %480 = vmatpush2.msra.mxu0 0.0
          %481 = vmatprep.subr.mxu0 0.0
          %482 = vmatpush2.msra.mxu0 0.0
          %483 = vmatprep.subr.mxu0 0.0
          %484 = vmatpush2.msra.mxu0 0.0
          %485 = vmatprep.subr.mxu0 0.0
          %486 = vmatpush2.msra.mxu0 0.0
          %487 = vmatprep.subr.mxu0 0.0
          %488 = vmatpush2.msra.mxu0 0.0
          %489 = vmatprep.subr.mxu0 0.0
          %490 = vmatpush2.msra.mxu0 0.0
          %491 = vmatprep.subr.mxu0 0.0
          %492 = vmatpush2.msra.mxu0 0.0
          %493 = vmatprep.subr.mxu0 0.0
          %494 = vmatpush2.msra.mxu0 0.0
          %495 = vmatprep.subr.mxu0 0.0
          %496 = vmatpush2.msra.mxu0 0.0
          %497 = vmatprep.subr.mxu0 0.0
          %498 = vmatpush2.msra.mxu0 0.0
          %499 = vmatprep.subr.mxu0 0.0
          %500 = vmatpush2.msra.mxu0 0.0
          %501 = vmatprep.subr.mxu0 0.0
          %502 = vmatpush2.msra.mxu0 0.0
          %503 = vmatprep.subr.mxu0 0.0
          %504 = vmatpush2.msra.mxu0 0.0
          %505 = vmatprep.subr.mxu0 0.0
          %506 = vmatpush2.msra.mxu0 0.0
          %507 = vmatprep.subr.mxu0 0.0
          %508 = vmatpush2.msra.mxu0 0.0
          %509 = vmatprep.mubr.f32.mxu0 0.0
          %510 = vmatmul.mubr.f32.gmra.mxu0 %v443
          %v511 = vpop.f32.mrf.mxu0
          %v512 = vadd.f32 %v439, %v511
          %v513 = vpop.f32.mrf.mxu0
          %514 = vdwg.mxu0
          %vm515 = vcmask 523264
          %516 = vst.msk [vmem:[#allocation2] sm:$0xff] %vm515, %v512
        $region56: #{swiglu_feed_forward.1} parent=47 // pred_fallthru
          _
        %p517 = scmp.eq.s32.totalorder %s30, 1
        // Predicated region
        $region57: #{swiglu_feed_forward.1} parent=47 // pred_check
          %p518 = pneg %p517
        $region58: #{swiglu_feed_forward.1} parent=47 // pred_check_branch
          %520 = sbr.rel (%p518) target = $region60
        $region59: #{swiglu_feed_forward.1} parent=47 // pred_region
          %p521 = scmp.eq.s32.totalorder %s31, 0
          // Predicated region
          $region61: #{swiglu_feed_forward.1} parent=59 // pred_check
            %p522 = pneg %p521
          $region62: #{swiglu_feed_forward.1} parent=59 // pred_check_branch
            %524 = sbr.rel (%p522) target = $region64
          $region63: #{swiglu_feed_forward.1} parent=59 // pred_region
            %vm525 = vcmask 261120
            %526 = vst.msk [vmem:[#allocation3] sm:$0xff] %vm525, 0.0
          $region64: #{swiglu_feed_forward.1} parent=59 // pred_fallthru
            _
          %v527 = vld [vmem:[#allocation2] sm:$0xff]
          %v528 = vld [vmem:[%s412] sm:$0xff]
          %v529 = vld [vmem:[%s412 + $0x8] sm:$0xff]
          %v530 = vld [vmem:[%s412 + $0x10] sm:$0xff]
          %v531 = vld [vmem:[%s412 + $0x18] sm:$0xff]
          %v532 = vld [vmem:[%s412 + $0x20] sm:$0xff]
          %v533 = vld [vmem:[%s412 + $0x28] sm:$0xff]
          %v534 = vld [vmem:[%s412 + $0x30] sm:$0xff]
          %v535 = vld [vmem:[%s412 + $0x38] sm:$0xff]
          %v536 = vld [vmem:[%s416] sm:$0x1]
          %v538 = vlaneseq
          %v539 = vshrl.u32 %v538, 7
          %v540 = vsub.s32 0, %v539
          %v541 = vrot.slane %v536, %v540
          %vm543 = vcmask 523264
          %v545 = vsel %vm543, %v527, 0
          %547 = vmatprep.subr.mxu0 0.0
          %548 = vmatpush1.msra.mxu0 0.0
          %549 = vmatprep.subr.mxu0 0.0
          %550 = vmatpush1.msra.mxu0 0.0
          %551 = vmatprep.subr.mxu0 0.0
          %552 = vmatpush1.msra.mxu0 0.0
          %553 = vmatprep.subr.mxu0 0.0
          %554 = vmatpush1.msra.mxu0 0.0
          %555 = vmatprep.subr.mxu0 0.0
          %556 = vmatpush1.msra.mxu0 0.0
          %557 = vmatprep.subr.mxu0 0.0
          %558 = vmatpush1.msra.mxu0 0.0
          %559 = vmatprep.subr.mxu0 0.0
          %560 = vmatpush1.msra.mxu0 0.0
          %561 = vmatprep.subr.mxu0 0.0
          %562 = vmatpush1.msra.mxu0 0.0
          %563 = vmatprep.subr.mxu0 0.0
          %564 = vmatpush1.msra.mxu0 %v535
          %565 = vmatprep.subr.mxu0 0.0
          %566 = vmatpush1.msra.mxu0 %v534
          %567 = vmatprep.subr.mxu0 0.0
          %568 = vmatpush1.msra.mxu0 %v533
          %569 = vmatprep.subr.mxu0 0.0
          %570 = vmatpush1.msra.mxu0 %v532
          %571 = vmatprep.subr.mxu0 0.0
          %572 = vmatpush1.msra.mxu0 %v531
          %573 = vmatprep.subr.mxu0 0.0
          %574 = vmatpush1.msra.mxu0 %v530
          %575 = vmatprep.subr.mxu0 0.0
          %576 = vmatpush1.msra.mxu0 %v529
          %577 = vmatprep.subr.mxu0 0.0
          %578 = vmatpush1.msra.mxu0 %v528
          %579 = vmatprep.subr.mxu0 0.0
          %580 = vmatpush2.msra.mxu0 0.0
          %581 = vmatprep.subr.mxu0 0.0
          %582 = vmatpush2.msra.mxu0 0.0
          %583 = vmatprep.subr.mxu0 0.0
          %584 = vmatpush2.msra.mxu0 0.0
          %585 = vmatprep.subr.mxu0 0.0
          %586 = vmatpush2.msra.mxu0 0.0
          %587 = vmatprep.subr.mxu0 0.0
          %588 = vmatpush2.msra.mxu0 0.0
          %589 = vmatprep.subr.mxu0 0.0
          %590 = vmatpush2.msra.mxu0 0.0
          %591 = vmatprep.subr.mxu0 0.0
          %592 = vmatpush2.msra.mxu0 0.0
          %593 = vmatprep.subr.mxu0 0.0
          %594 = vmatpush2.msra.mxu0 0.0
          %595 = vmatprep.subr.mxu0 0.0
          %596 = vmatpush2.msra.mxu0 0.0
          %597 = vmatprep.subr.mxu0 0.0
          %598 = vmatpush2.msra.mxu0 0.0
          %599 = vmatprep.subr.mxu0 0.0
          %600 = vmatpush2.msra.mxu0 0.0
          %601 = vmatprep.subr.mxu0 0.0
          %602 = vmatpush2.msra.mxu0 0.0
          %603 = vmatprep.subr.mxu0 0.0
          %604 = vmatpush2.msra.mxu0 0.0
          %605 = vmatprep.subr.mxu0 0.0
          %606 = vmatpush2.msra.mxu0 0.0
          %607 = vmatprep.subr.mxu0 0.0
          %608 = vmatpush2.msra.mxu0 0.0
          %609 = vmatprep.subr.mxu0 0.0
          %610 = vmatpush2.msra.mxu0 0.0
          %611 = vmatprep.mubr.f32.mxu0 0.0
          %612 = vmatmul.mubr.f32.gmra.mxu0 %v545
          %v613 = vpop.f32.mrf.mxu0
          %v614 = vadd.f32 %v541, %v613
          %v615 = vpop.f32.mrf.mxu0
          %616 = vdwg.mxu0
          %v617 = vsub.f32 0.0, %v527
          %v618 = vmul.f32 %v617, 1.442695
          %v619 = vpow.pop %v618
          %v620 = vadd.f32 %v619, 1.0
          %v621 = vrcp.pop %v620
          %v622 = vmul.f32 %v527, %v621
          %v623 = vmul.f32 %v622, %v614
          %v624 = vld [vmem:[#allocation3] sm:$0xff]
          %v625 = vld [vmem:[%s422] sm:$0xff]
          %v626 = vld [vmem:[%s422 + $0x8] sm:$0xff]
          %v627 = vld [vmem:[%s422 + $0x10] sm:$0xff]
          %v628 = vld [vmem:[%s422 + $0x18] sm:$0xff]
          %v629 = vld [vmem:[%s422 + $0x20] sm:$0xff]
          %v630 = vld [vmem:[%s422 + $0x28] sm:$0xff]
          %v631 = vld [vmem:[%s422 + $0x30] sm:$0xff]
          %v632 = vld [vmem:[%s422 + $0x38] sm:$0xff]
          %v634 = vsel %vm543, %v623, 0
          %636 = vmatprep.subr.mxu0 0.0
          %637 = vmatpush1.msra.mxu0 0.0
          %638 = vmatprep.subr.mxu0 0.0
          %639 = vmatpush1.msra.mxu0 0.0
          %640 = vmatprep.subr.mxu0 0.0
          %641 = vmatpush1.msra.mxu0 0.0
          %642 = vmatprep.subr.mxu0 0.0
          %643 = vmatpush1.msra.mxu0 0.0
          %644 = vmatprep.subr.mxu0 0.0
          %645 = vmatpush1.msra.mxu0 0.0
          %646 = vmatprep.subr.mxu0 0.0
          %647 = vmatpush1.msra.mxu0 0.0
          %648 = vmatprep.subr.mxu0 0.0
          %649 = vmatpush1.msra.mxu0 0.0
          %650 = vmatprep.subr.mxu0 0.0
          %651 = vmatpush1.msra.mxu0 0.0
          %652 = vmatprep.subr.mxu0 0.0
          %653 = vmatpush1.msra.mxu0 %v632
          %654 = vmatprep.subr.mxu0 0.0
          %655 = vmatpush1.msra.mxu0 %v631
          %656 = vmatprep.subr.mxu0 0.0
          %657 = vmatpush1.msra.mxu0 %v630
          %658 = vmatprep.subr.mxu0 0.0
          %659 = vmatpush1.msra.mxu0 %v629
          %660 = vmatprep.subr.mxu0 0.0
          %661 = vmatpush1.msra.mxu0 %v628
          %662 = vmatprep.subr.mxu0 0.0
          %663 = vmatpush1.msra.mxu0 %v627
          %664 = vmatprep.subr.mxu0 0.0
          %665 = vmatpush1.msra.mxu0 %v626
          %666 = vmatprep.subr.mxu0 0.0
          %667 = vmatpush1.msra.mxu0 %v625
          %668 = vmatprep.subr.mxu0 0.0
          %669 = vmatpush2.msra.mxu0 0.0
          %670 = vmatprep.subr.mxu0 0.0
          %671 = vmatpush2.msra.mxu0 0.0
          %672 = vmatprep.subr.mxu0 0.0
          %673 = vmatpush2.msra.mxu0 0.0
          %674 = vmatprep.subr.mxu0 0.0
          %675 = vmatpush2.msra.mxu0 0.0
          %676 = vmatprep.subr.mxu0 0.0
          %677 = vmatpush2.msra.mxu0 0.0
          %678 = vmatprep.subr.mxu0 0.0
          %679 = vmatpush2.msra.mxu0 0.0
          %680 = vmatprep.subr.mxu0 0.0
          %681 = vmatpush2.msra.mxu0 0.0
          %682 = vmatprep.subr.mxu0 0.0
          %683 = vmatpush2.msra.mxu0 0.0
          %684 = vmatprep.subr.mxu0 0.0
          %685 = vmatpush2.msra.mxu0 0.0
          %686 = vmatprep.subr.mxu0 0.0
          %687 = vmatpush2.msra.mxu0 0.0
          %688 = vmatprep.subr.mxu0 0.0
          %689 = vmatpush2.msra.mxu0 0.0
          %690 = vmatprep.subr.mxu0 0.0
          %691 = vmatpush2.msra.mxu0 0.0
          %692 = vmatprep.subr.mxu0 0.0
          %693 = vmatpush2.msra.mxu0 0.0
          %694 = vmatprep.subr.mxu0 0.0
          %695 = vmatpush2.msra.mxu0 0.0
          %696 = vmatprep.subr.mxu0 0.0
          %697 = vmatpush2.msra.mxu0 0.0
          %698 = vmatprep.subr.mxu0 0.0
          %699 = vmatpush2.msra.mxu0 0.0
          %700 = vmatprep.mubr.f32.mxu0 0.0
          %701 = vmatmul.mubr.f32.gmra.mxu0 %v634
          %v702 = vpop.f32.mrf.mxu0
          %v703 = vadd.f32 0.0, %v702
          %v704 = vpop.f32.mrf.mxu0
          %705 = vdwg.mxu0
          %v706 = vadd.f32 %v624, %v703
          %vm707 = vcmask 261120
          %708 = vst.msk [vmem:[#allocation3] sm:$0xff] %vm707, %v706
          // Predicated region
          $region65: #{swiglu_feed_forward.1} parent=59 // pred_check
            %p709 = pneg %p521
          $region66: #{swiglu_feed_forward.1} parent=59 // pred_check_branch
            %711 = sbr.rel (%p709) target = $region68
          $region67: #{swiglu_feed_forward.1} parent=59 // pred_region
            %v712 = vld [vmem:[#allocation3] sm:$0xff]
            %v713 = vld [vmem:[%s6] sm:$0x1]
            %v715 = vlaneseq
            %v716 = vshrl.u32 %v715, 7
            %v717 = vsub.s32 0, %v716
            %v718 = vrot.slane %v713, %v717
            %v720 = vadd.f32 %v712, %v718
            %721 = vst.msk [vmem:[%s396] sm:$0xff] %vm707, %v720
          $region68: #{swiglu_feed_forward.1} parent=59 // pred_fallthru
            _
        $region60: #{swiglu_feed_forward.1} parent=47 // pred_fallthru
          _
        %s722 = sand.u32 %s236, 1
        %s723 = scalar_lea.sflag [#allocation6], %s722
        %s724 = sand.u32 %s236, 1
        %s725 = smul.addr %s724, 8
        %s726 = scalar_lea.vmem [#allocation7], %s725
        // Predicated region
        $region69: #{swiglu_feed_forward.1} parent=47 // pred_check
          %p727 = pneg %p246
        $region70: #{swiglu_feed_forward.1} parent=47 // pred_check_branch
          %729 = sbr.rel (%p727) target = $region72
        $region71: #{swiglu_feed_forward.1} parent=47 // pred_region
          %s731 = ssub.s32 128, 128
          %732 = vsyncadd %s723, %s731
          %s733 = smul.addr %s29, 128
          %s734 = scalar_lea.hbm %s7, %s733
          %s736 = sshll.u32 %s726, 4
          %s737 = int_to_ptr.vmem [resolvable:$true] %s736
          %739 = dma.vmem_to_hbm [thread:$0]  %s737, 128, %s734, %s723
        $region72: #{swiglu_feed_forward.1} parent=47 // pred_fallthru
          _
      $region48: #{swiglu_feed_forward.1} parent=5 // pred_fallthru
        _
      %p740 = scmp.le.s32.totalorder 2, %s19
      // Predicated region
      $region73: #{swiglu_feed_forward.1} parent=5 // pred_check
        %p741 = pneg %p740
      $region74: #{swiglu_feed_forward.1} parent=5 // pred_check_branch
        %743 = sbr.rel (%p741) target = $region76
      $region75: #{swiglu_feed_forward.1} parent=5 // pred_region
        %s744 = ssub.s32 %s19, 2
        // Predicated region
        $region77: #{swiglu_feed_forward.1} parent=75 // pred_check
          %p745 = pneg %p252
        $region78: #{swiglu_feed_forward.1} parent=75 // pred_check_branch
          %747 = sbr.rel (%p745) target = $region80
        $region79: #{swiglu_feed_forward.1} parent=75 // pred_region
          %s748 = sand.u32 %s237, 1
          %s749 = scalar_lea.sflag [#allocation6], %s748
          %s750 = sand.u32 %s237, 1
          %s751 = smul.addr %s750, 8
          %s752 = scalar_lea.vmem [#allocation7], %s751
          %753 = dma.done %s749, 128
        $region80: #{swiglu_feed_forward.1} parent=75 // pred_fallthru
          _
      $region76: #{swiglu_feed_forward.1} parent=5 // pred_fallthru
        _
    $region6: #{swiglu_feed_forward.1} parent=1 // loop_footer
      %s23 = sadd.s32 1, %s19
    $region7: #{swiglu_feed_forward.1} parent=1 // loop_footer_branch
      %18 = sbr.rel target = $region3
    $region8: #{swiglu_feed_forward.1} parent=1 // loop_exit
      _
    %754 = vsyncpa [#allocation5], 1
    %s755 = scalar_lea.sflag [#allocation5], 1
    %756 = vsyncpa %s755, 1
    %757 = vsyncpa [#allocation6], 1
    %s758 = scalar_lea.sflag [#allocation6], 1
    %759 = vsyncpa %s758, 1

</llo_original>
